<compile_context>
chip_gen: v5e
topology: v5e:2x2
jax: 0.10.0
libtpu: 0.0.40
codegen_flags: <defaults>
</compile_context>

<pallas_src>
import math
import jax
import jax.numpy as jnp
from jax.experimental import pallas as pl
from jax.experimental.pallas import tpu as pltpu


def _agnn_kernel(x_ref, adj_ref, bias_ref, w_ref, o_ref):
    # x_ref:    (Bb, N, Gc, F_in)   Bb batch rows, Gc fused time slabs per chunk
    # adj_ref:  (C, C)  C = N*Gc; node-major strided block-diag adj * 1/sqrt(F_in)
    # bias_ref: (C, C)  additive softmax mask: 0 on same-time pairs, -1e30 elsewhere
    # w_ref:    (F_in, F_out)  Theta weight, transposed
    # o_ref:    (Bb, N, Gc, F_out)
    bb, n, gc, f_in = x_ref.shape
    f_out = w_ref.shape[-1]
    c = n * gc
    inv_sqrt_f = 1.0 / math.sqrt(f_in)

    adj = adj_ref[...]
    bias = bias_ref[...]
    w = w_ref[...].astype(jnp.float32)

    def body(b, carry):
        # Node-major flatten: row r = node*Gc + g  (node r//Gc, time t0 + r%Gc).
        # Merges leading (sublane) dims only -> layout-trivial reshape.
        xc = x_ref[b].reshape(c, f_in).astype(jnp.float32)           # (C, F_in)

        # One fused MXU matmul covers Gc attention slabs; contraction over the
        # feature dim of both operands (no explicit transpose / XLU work).
        score = jax.lax.dot_general(
            xc * inv_sqrt_f, xc, (((1,), (1,)), ((), ())),
            preferred_element_type=jnp.float32) + bias               # (C, C)

        # masked, max-stabilized softmax (off-time entries -> exp == 0)
        score = score - jnp.max(score, axis=-1, keepdims=True)
        e = jnp.exp(score)
        denom = jnp.sum(e, axis=-1, keepdims=True)
        att = e * pl.reciprocal(denom, approx=False)  # exact: keeps 1e-4 tolerance

        # (Adj / sqrt(F_in)) * att, fused neighbor aggregation, Theta matmul, relu.
        a = adj * att                                                # (C, C)
        y = jnp.dot(a, xc, preferred_element_type=jnp.float32)       # (C, F_in)
        z = jnp.dot(y, w, preferred_element_type=jnp.float32)        # (C, F_out)
        z = jnp.maximum(z, 0.0)

        # rows are node-major, so this is already native (N, Gc, F_out) layout
        o_ref[b] = z.reshape(n, gc, f_out).astype(o_ref.dtype)
        return carry

    jax.lax.fori_loop(0, bb, body, None, unroll=bb <= 8)


def spatial_attention_scaled_gcn(x, adj, theta_w, *, block_b=None,
                                 vmem_limit_bytes=None):
    """
    x:        (B, N, T, F_in)
    adj:      (N, N)        sym-normalized adjacency
    theta_w:  (F_out, F_in) PyTorch nn.Linear weight layout (bias=False)
    returns:  (B, N, T, F_out)
    """
    B, N, T, F_in = x.shape
    F_out = theta_w.shape[0]

    # Time slabs fused per block-diagonal chunk: make the fused operand ~128 rows,
    # rounded to a multiple of 8 (f32 sublane tile / BlockSpec divisibility rule).
    # TODO(synk): for very large N (>~128) the (C, C) intermediates get big; a
    # score-tiled variant would be needed there.
    Gc = 8 * max(1, -(-128 // (8 * N)))
    C = N * Gc
    T_pad = -(-T // Gc) * Gc
    t_blocks = T_pad // Gc

    # grid-invariant constants (VMEM-resident in the kernel)
    w_t = theta_w.T.astype(jnp.float32)                       # (F_in, F_out)
    adj_scaled = adj.astype(jnp.float32) / math.sqrt(F_in)    # fold 2nd 1/sqrt(F_in)
    r = jnp.arange(C, dtype=jnp.int32)
    same_t = (r[:, None] % Gc) == (r[None, :] % Gc)           # node-major: r = n*Gc+g
    adj_strided = jnp.where(
        same_t, adj_scaled[r[:, None] // Gc, r[None, :] // Gc], 0.0
    ).astype(jnp.float32)                                     # (C, C)
    bias = jnp.where(same_t, 0.0, -1e30).astype(jnp.float32)  # (C, C)

    # Batch rows per grid step, from a lane-padded / double-buffered VMEM budget
    # (safe on v7x's 64 MiB VMEM); keep >=2 parallel grid steps when possible so
    # both v7x TensorCores get work.
    if block_b is None:
        vmem_budget = 8 * 1024 * 1024
        per_b = 4 * N * Gc * 128 * 4      # x + out blocks, x2 buffers, padded lanes
        block_b = max(1, min(B, vmem_budget // per_b))
        while block_b > 1 and t_blocks * (-(-B // block_b)) < 2:
            block_b = max(1, block_b // 2)
    Bb = max(1, min(block_b, B))
    B_pad = -(-B // Bb) * Bb

    x_p = x
    if (B_pad, T_pad) != (B, T):
        # zero-padded slabs stay finite through the masked softmax; sliced off below
        x_p = jnp.pad(x, ((0, B_pad - B), (0, 0), (0, T_pad - T), (0, 0)))

    out = pl.pallas_call(
        _agnn_kernel,
        out_shape=jax.ShapeDtypeStruct((B_pad, N, T_pad, F_out), x.dtype),
        grid=(B_pad // Bb, t_blocks),
        in_specs=[
            pl.BlockSpec((Bb, N, Gc, F_in), lambda bi, ti: (bi, 0, ti, 0)),
            pl.BlockSpec((C, C), lambda bi, ti: (0, 0)),            # VMEM-resident
            pl.BlockSpec((C, C), lambda bi, ti: (0, 0)),            # VMEM-resident
            pl.BlockSpec((F_in, F_out), lambda bi, ti: (0, 0)),     # VMEM-resident
        ],
        out_specs=pl.BlockSpec((Bb, N, Gc, F_out), lambda bi, ti: (bi, 0, ti, 0)),
        compiler_params=pltpu.CompilerParams(
            dimension_semantics=("parallel", "parallel"),
            vmem_limit_bytes=vmem_limit_bytes),
    )(x_p, adj_strided, bias, w_t)

    if (B_pad, T_pad) != (B, T):
        out = out[:B, :, :T, :]
    return out


def _reference(x, adj, theta_w):
    """Pure-JAX reference mirroring the PyTorch code."""
    B, N, T, F_in = x.shape
    F_out = theta_w.shape[0]
    x_bt = jnp.transpose(x, (0, 2, 1, 3)).reshape(B * T, N, F_in)
    score = jnp.einsum("bnf,bmf->bnm", x_bt, x_bt) / math.sqrt(F_in)
    att = jax.nn.softmax(score, axis=-1) / math.sqrt(F_in)
    y = jnp.einsum("bnm,bmf->bnf", adj[None] * att, x_bt)
    z = jax.nn.relu(jnp.einsum("bnf,of->bno", y, theta_w))
    return jnp.transpose(z.reshape(B, T, N, F_out), (0, 2, 1, 3))


if __name__ == "__main__":
    B, N, T, F_in, F_out = 2, 16, 8, 4, 8

    key = jax.random.PRNGKey(0)
    kx, ka, kw = jax.random.split(key, 3)

    x = jax.random.normal(kx, (B, N, T, F_in), dtype=jnp.float32)

    # deterministic sym-normalized adjacency: D^{-1/2} (A + I) D^{-1/2}
    a_raw = (jax.random.uniform(ka, (N, N)) > 0.7).astype(jnp.float32)
    a_raw = jnp.maximum(a_raw, a_raw.T) + jnp.eye(N, dtype=jnp.float32)
    d_inv_sqrt = 1.0 / jnp.sqrt(jnp.sum(a_raw, axis=-1))
    adj = d_inv_sqrt[:, None] * a_raw * d_inv_sqrt[None, :]

    # Theta weight (F_out, F_in), PyTorch nn.Linear layout (bias=False)
    bound = 1.0 / math.sqrt(F_in)
    theta_w = jax.random.uniform(kw, (F_out, F_in), minval=-bound, maxval=bound,
                                 dtype=jnp.float32)

    out = spatial_attention_scaled_gcn(x, adj, theta_w)
    out = jax.block_until_ready(out)

    ref = _reference(x, adj, theta_w)
    assert out.shape == (B, N, T, F_out)
    assert jnp.allclose(out, ref, atol=1e-4, rtol=1e-4)

    print("KERNEL_OK")
</pallas_src>

<mosaic_0001>
module attributes {stable_mosaic.version = 11 : i64} {
  func.func @_agnn_kernel(%arg0: i32, %arg1: i32, %arg2: memref<1x16x8x4xf32, #tpu.memory_space<vmem>>, %arg3: memref<128x128xf32, #tpu.memory_space<vmem>>, %arg4: memref<128x128xf32, #tpu.memory_space<vmem>>, %arg5: memref<4x8xf32, #tpu.memory_space<vmem>>, %arg6: memref<1x16x8x8xf32, #tpu.memory_space<vmem>>) attributes {dimension_semantics = [#tpu.dimension_semantics<parallel>, #tpu.dimension_semantics<parallel>], iteration_bounds = array<i64: 2, 1>, scalar_prefetch = 0 : i64, scratch_operands = 0 : i64, tpu.core_type = #tpu.core_type<tc>, window_params = [{transform_indices = @transform_0, window_bounds = array<i64: 1, 16, 8, 4>}, {pipeline_mode = #tpu.pipeline_mode<synchronous>, transform_indices = @transform_1, window_bounds = array<i64: 128, 128>}, {pipeline_mode = #tpu.pipeline_mode<synchronous>, transform_indices = @transform_2, window_bounds = array<i64: 128, 128>}, {pipeline_mode = #tpu.pipeline_mode<synchronous>, transform_indices = @transform_3, window_bounds = array<i64: 4, 8>}, {transform_indices = @transform_4, window_bounds = array<i64: 1, 16, 8, 8>}]} {
    %c0 = arith.constant 0 : index
    %c0_0 = arith.constant 0 : index
    %0 = vector.load %arg3[%c0, %c0_0] : memref<128x128xf32, #tpu.memory_space<vmem>>, vector<128x128xf32>
    %c0_1 = arith.constant 0 : index
    %c0_2 = arith.constant 0 : index
    %1 = vector.load %arg4[%c0_1, %c0_2] : memref<128x128xf32, #tpu.memory_space<vmem>>, vector<128x128xf32>
    %c0_3 = arith.constant 0 : index
    %c0_4 = arith.constant 0 : index
    %2 = vector.load %arg5[%c0_3, %c0_4] : memref<4x8xf32, #tpu.memory_space<vmem>>, vector<4x8xf32>
    %c0_i32 = arith.constant 0 : i32
    %3 = arith.index_cast %c0_i32 : i32 to index
    %c0_5 = arith.constant 0 : index
    %c0_6 = arith.constant 0 : index
    %c0_7 = arith.constant 0 : index
    %4 = vector.load %arg2[%3, %c0_5, %c0_6, %c0_7] : memref<1x16x8x4xf32, #tpu.memory_space<vmem>>, vector<1x16x8x4xf32>
    %5 = vector.shape_cast %4 : vector<1x16x8x4xf32> to vector<16x8x4xf32>
    %6 = vector.shape_cast %5 : vector<16x8x4xf32> to vector<128x4xf32>
    %cst = arith.constant 5.000000e-01 : f32
    %7 = vector.broadcast %cst : f32 to vector<128x4xf32>
    %8 = arith.mulf %6, %7 : vector<128x4xf32>
    %cst_8 = arith.constant dense<0.000000e+00> : vector<128x128xf32>
    %9 = tpu.matmul %8, %6, %cst_8 {dimension_numbers = #tpu.dot_dimension_numbers<[1], [1], [0], [0], [0, 0, 1, 0], [], []>} : vector<128x4xf32>, vector<128x4xf32>, vector<128x128xf32> -> vector<128x128xf32>
    %10 = arith.addf %9, %1 : vector<128x128xf32>
    %cst_9 = arith.constant dense<0xFF800000> : vector<128xf32>
    %11 = vector.multi_reduction <maximumf>, %10, %cst_9 [1] : vector<128x128xf32> to vector<128xf32>
    %12 = vector.shape_cast %11 : vector<128xf32> to vector<128x1xf32>
    %13 = vector.broadcast %12 : vector<128x1xf32> to vector<128x128xf32>
    %14 = arith.subf %10, %13 : vector<128x128xf32>
    %15 = math.exp %14 : vector<128x128xf32>
    %cst_10 = arith.constant dense<0.000000e+00> : vector<128xf32>
    %16 = vector.multi_reduction <add>, %15, %cst_10 [1] : vector<128x128xf32> to vector<128xf32>
    %17 = vector.shape_cast %16 : vector<128xf32> to vector<128x1xf32>
    %18 = tpu.reciprocal %17 : vector<128x1xf32> -> vector<128x1xf32>
    %19 = vector.broadcast %18 : vector<128x1xf32> to vector<128x128xf32>
    %20 = arith.mulf %15, %19 : vector<128x128xf32>
    %21 = arith.mulf %0, %20 : vector<128x128xf32>
    %cst_11 = arith.constant dense<0.000000e+00> : vector<128x4xf32>
    %22 = tpu.matmul %21, %6, %cst_11 {dimension_numbers = #tpu.dot_dimension_numbers<[1], [0], [0], [1], [0, 0, 1, 1], [], []>} : vector<128x128xf32>, vector<128x4xf32>, vector<128x4xf32> -> vector<128x4xf32>
    %cst_12 = arith.constant dense<0.000000e+00> : vector<128x8xf32>
    %23 = tpu.matmul %22, %2, %cst_12 {dimension_numbers = #tpu.dot_dimension_numbers<[1], [0], [0], [1], [0, 0, 1, 1], [], []>} : vector<128x4xf32>, vector<4x8xf32>, vector<128x8xf32> -> vector<128x8xf32>
    %cst_13 = arith.constant 0.000000e+00 : f32
    %24 = vector.broadcast %cst_13 : f32 to vector<128x8xf32>
    %25 = arith.maximumf %23, %24 : vector<128x8xf32>
    %26 = vector.shape_cast %25 : vector<128x8xf32> to vector<16x8x8xf32>
    %27 = arith.index_cast %c0_i32 : i32 to index
    %c0_14 = arith.constant 0 : index
    %c0_15 = arith.constant 0 : index
    %c0_16 = arith.constant 0 : index
    %28 = vector.load %arg6[%27, %c0_14, %c0_15, %c0_16] : memref<1x16x8x8xf32, #tpu.memory_space<vmem>>, vector<1x16x8x8xf32>
    %29 = vector.shape_cast %28 : vector<1x16x8x8xf32> to vector<16x8x8xf32>
    %30 = vector.shape_cast %26 : vector<16x8x8xf32> to vector<1x16x8x8xf32>
    tpu.vector_store %arg6[%27, %c0_14, %c0_15, %c0_16], %30 {strides = array<i32>} : memref<1x16x8x8xf32, #tpu.memory_space<vmem>>, vector<1x16x8x8xf32>,
    %c1_i32 = arith.constant 1 : i32
    return
  }
  func.func @transform_0(%arg0: i32, %arg1: i32) -> (i32, i32, i32, i32) {
    %c0_i32 = arith.constant 0 : i32
    %c0_i32_0 = arith.constant 0 : i32
    %c0_i32_1 = arith.constant 0 : i32
    return %arg0, %c0_i32, %arg1, %c0_i32_0 : i32, i32, i32, i32
  }
  func.func @transform_1(%arg0: i32, %arg1: i32) -> (i32, i32) {
    %c0_i32 = arith.constant 0 : i32
    %c0_i32_0 = arith.constant 0 : i32
    %c0_i32_1 = arith.constant 0 : i32
    return %c0_i32, %c0_i32_0 : i32, i32
  }
  func.func @transform_2(%arg0: i32, %arg1: i32) -> (i32, i32) {
    %c0_i32 = arith.constant 0 : i32
    %c0_i32_0 = arith.constant 0 : i32
    %c0_i32_1 = arith.constant 0 : i32
    return %c0_i32, %c0_i32_0 : i32, i32
  }
  func.func @transform_3(%arg0: i32, %arg1: i32) -> (i32, i32) {
    %c0_i32 = arith.constant 0 : i32
    %c0_i32_0 = arith.constant 0 : i32
    %c0_i32_1 = arith.constant 0 : i32
    return %c0_i32, %c0_i32_0 : i32, i32
  }
  func.func @transform_4(%arg0: i32, %arg1: i32) -> (i32, i32, i32, i32) {
    %c0_i32 = arith.constant 0 : i32
    %c0_i32_0 = arith.constant 0 : i32
    %c0_i32_1 = arith.constant 0 : i32
    return %arg0, %c0_i32, %arg1, %c0_i32_0 : i32, i32, i32, i32
  }
}

</mosaic_0001>

<llo_original>
// kernel: tpu_custom_call.1
$region0: #{tpu_custom_call.1}
  #allocation0 [shape = 'u32[]', space=smem, size = 0x4, offset = 0x4, fixed_abs, tag = 'smem constant byte address 0x4 - core index']
  #allocation1 [shape = 'u32[72,128]{1,0:T(1,128)}', space=vmem, size = 0x9000, scoped, tag = 'internal scratch']
  %s0 = inlined_call_operand.vmem [shape: f32[2,16,8,4], index: 0, kind: input, shape index: {}]
  %s1 = inlined_call_operand.vmem [shape: f32[128,128], index: 1, kind: input, shape index: {}]
  %s2 = inlined_call_operand.vmem [shape: f32[128,128], index: 2, kind: input, shape index: {}]
  %s3 = inlined_call_operand.vmem [shape: f32[4,8], index: 3, kind: input, shape index: {}]
  %s4 = inlined_call_operand.vmem [shape: f32[2,16,8,8], index: 4, kind: output, shape index: {}]
  %s5 = sld [smem:[#allocation0]]
  $region49: #{tpu_custom_call.1} parent=0
    _
  %s7 = ssub.s32 1, %s5
  %s8 = scalar_select 0, %s7, %s5
  loop: start=0, step=1, limit=4
  $region2: #{tpu_custom_call.1} parent=0 // loop_pre_header
    _
  $region3: #{tpu_custom_call.1} parent=0 // loop_header
    %s10 = sphi 0, %s14
    %p11 = scmp.ge.s32.totalorder %s10, 4
    %s17 = sphi 0, %s29
    %s18 = sphi 0, %s25
    %s19 = sphi 0, %s17
    %s20 = sphi 0, %s18
    %s21 = sphi 0, %s19
    %s22 = sphi 0, %s20
    %s34 = sphi 0, %s36
    %s37 = sphi 0, %s34
    %s38 = sphi 0, %s37
    %s54 = sphi 0, %s38
    %s58 = sphi 0, %s58
    %s60 = sphi 0, %s58
    %s61 = sphi 0, %s60
    %s75 = sphi 0, %s61
    %s79 = sphi 0, %s79
    %s81 = sphi 0, %s79
    %s82 = sphi 0, %s81
    %s96 = sphi 0, %s82
    %s100 = sphi 0, %s100
    %s102 = sphi 0, %s100
    %s103 = sphi 0, %s102
    %s117 = sphi 0, %s103
    %s125 = sphi 0, %s127
    %s128 = sphi 0, %s125
    %s129 = sphi 0, %s128
    %s145 = sphi 0, %s129
  $region4: #{tpu_custom_call.1} parent=0 // loop_header_branch
    %13 = sbr.rel (%p11) target = $region8
  $region5: #{tpu_custom_call.1} parent=0 // loop_body
    %s15 = ssub.s32 %s10, 1
    %s16 = ssub.s32 %s10, 2
    %s23 = sadd.s32 1, %s18
    %p24 = scmp.ge.s32.totalorder %s23, 1
    %s25 = scalar_select %p24, 0, %s23
    %s26 = sadd.s32 1, %s17
    %s27 = scalar_select %p24, %s26, %s17
    %p28 = scmp.ge.s32.totalorder %s27, 2
    %s29 = scalar_select %p28, 0, %s27
    %s30 = ssub.s32 %s17, %s29
    %s31 = ssub.s32 %s18, %s25
    %s32 = sor.u32 %s30, %s31
    %p33 = scmp.eq.s32.totalorder %s32, 0
    %s35 = sadd.s32 %s34, 1
    %s36 = scalar_select %p33, %s34, %s35
    %p39 = pneg %p33
    %p40 = scmp.eq.s32.totalorder %s10, 1
    %p41 = por %p39, %p40
    %p42 = scmp.ne.s32.totalorder %s34, %s37
    %p43 = scmp.eq.s32.totalorder %s10, 0
    %p44 = por %p42, %p43
    %p45 = scmp.ne.s32.totalorder %s34, %s37
    %p46 = scmp.eq.s32.totalorder %s15, 1
    %p47 = por %p45, %p46
    %p48 = scmp.ne.s32.totalorder %s37, %s38
    %p49 = scmp.eq.s32.totalorder %s15, 0
    %p50 = por %p48, %p49
    %p51 = scmp.ne.s32.totalorder %s37, %s38
    %p52 = scmp.eq.s32.totalorder %s16, 1
    %p53 = por %p51, %p52
    %p55 = scmp.ne.s32.totalorder %s38, %s54
    %p56 = scmp.eq.s32.totalorder %s16, 0
    %p57 = por %p55, %p56
    %s59 = sadd.s32 %s58, 1
    %p62 = scmp.eq.s32.totalorder %s10, 1
    %p63 = scmp.ne.s32.totalorder %s58, %s60
    %p64 = scmp.eq.s32.totalorder %s10, 0
    %p65 = por %p63, %p64
    %p66 = scmp.ne.s32.totalorder %s58, %s60
    %p67 = scmp.eq.s32.totalorder %s15, 1
    %p68 = por %p66, %p67
    %p69 = scmp.ne.s32.totalorder %s60, %s61
    %p70 = scmp.eq.s32.totalorder %s15, 0
    %p71 = por %p69, %p70
    %p72 = scmp.ne.s32.totalorder %s60, %s61
    %p73 = scmp.eq.s32.totalorder %s16, 1
    %p74 = por %p72, %p73
    %p76 = scmp.ne.s32.totalorder %s61, %s75
    %p77 = scmp.eq.s32.totalorder %s16, 0
    %p78 = por %p76, %p77
    %s80 = sadd.s32 %s79, 1
    %p83 = scmp.eq.s32.totalorder %s10, 1
    %p84 = scmp.ne.s32.totalorder %s79, %s81
    %p85 = scmp.eq.s32.totalorder %s10, 0
    %p86 = por %p84, %p85
    %p87 = scmp.ne.s32.totalorder %s79, %s81
    %p88 = scmp.eq.s32.totalorder %s15, 1
    %p89 = por %p87, %p88
    %p90 = scmp.ne.s32.totalorder %s81, %s82
    %p91 = scmp.eq.s32.totalorder %s15, 0
    %p92 = por %p90, %p91
    %p93 = scmp.ne.s32.totalorder %s81, %s82
    %p94 = scmp.eq.s32.totalorder %s16, 1
    %p95 = por %p93, %p94
    %p97 = scmp.ne.s32.totalorder %s82, %s96
    %p98 = scmp.eq.s32.totalorder %s16, 0
    %p99 = por %p97, %p98
    %s101 = sadd.s32 %s100, 1
    %p104 = scmp.eq.s32.totalorder %s10, 1
    %p105 = scmp.ne.s32.totalorder %s100, %s102
    %p106 = scmp.eq.s32.totalorder %s10, 0
    %p107 = por %p105, %p106
    %p108 = scmp.ne.s32.totalorder %s100, %s102
    %p109 = scmp.eq.s32.totalorder %s15, 1
    %p110 = por %p108, %p109
    %p111 = scmp.ne.s32.totalorder %s102, %s103
    %p112 = scmp.eq.s32.totalorder %s15, 0
    %p113 = por %p111, %p112
    %p114 = scmp.ne.s32.totalorder %s102, %s103
    %p115 = scmp.eq.s32.totalorder %s16, 1
    %p116 = por %p114, %p115
    %p118 = scmp.ne.s32.totalorder %s103, %s117
    %p119 = scmp.eq.s32.totalorder %s16, 0
    %p120 = por %p118, %p119
    %s121 = ssub.s32 %s17, %s29
    %s122 = ssub.s32 %s18, %s25
    %s123 = sor.u32 %s121, %s122
    %p124 = scmp.eq.s32.totalorder %s123, 0
    %s126 = sadd.s32 %s125, 1
    %s127 = scalar_select %p124, %s125, %s126
    %p130 = pneg %p124
    %p131 = scmp.eq.s32.totalorder %s10, 1
    %p132 = por %p130, %p131
    %p133 = scmp.ne.s32.totalorder %s125, %s128
    %p134 = scmp.eq.s32.totalorder %s10, 0
    %p135 = por %p133, %p134
    %p136 = scmp.ne.s32.totalorder %s125, %s128
    %p137 = scmp.eq.s32.totalorder %s15, 1
    %p138 = por %p136, %p137
    %p139 = scmp.ne.s32.totalorder %s128, %s129
    %p140 = scmp.eq.s32.totalorder %s15, 0
    %p141 = por %p139, %p140
    %p142 = scmp.ne.s32.totalorder %s128, %s129
    %p143 = scmp.eq.s32.totalorder %s16, 1
    %p144 = por %p142, %p143
    %p146 = scmp.ne.s32.totalorder %s129, %s145
    %p147 = scmp.eq.s32.totalorder %s16, 0
    %p148 = por %p146, %p147
    %p149 = scmp.le.s32.totalorder 1, %s10
    %p150 = scmp.lt.s32.totalorder %s10, 3
    %p151 = pnand %p149, %p150
    %p152 = pneg %p151
    // Predicated region
    $region9: #{tpu_custom_call.1} parent=5 // pred_check
      _
    $region10: #{tpu_custom_call.1} parent=5 // pred_check_branch
      %154 = sbr.rel (%p151) target = $region12
    $region11: #{tpu_custom_call.1} parent=5 // pred_region
      %s155 = ssub.s32 %s10, 1
      // Predicated region
      $region13: #{tpu_custom_call.1} parent=11 // pred_check
        %p156 = pneg %p71
      $region14: #{tpu_custom_call.1} parent=11 // pred_check_branch
        %158 = sbr.rel (%p156) target = $region16
      $region15: #{tpu_custom_call.1} parent=11 // pred_region
        _
      $region16: #{tpu_custom_call.1} parent=11 // pred_fallthru
        _
      // Predicated region
      $region17: #{tpu_custom_call.1} parent=11 // pred_check
        %p159 = pneg %p92
      $region18: #{tpu_custom_call.1} parent=11 // pred_check_branch
        %161 = sbr.rel (%p159) target = $region20
      $region19: #{tpu_custom_call.1} parent=11 // pred_region
        _
      $region20: #{tpu_custom_call.1} parent=11 // pred_fallthru
        _
      // Predicated region
      $region21: #{tpu_custom_call.1} parent=11 // pred_check
        %p162 = pneg %p113
      $region22: #{tpu_custom_call.1} parent=11 // pred_check_branch
        %164 = sbr.rel (%p162) target = $region24
      $region23: #{tpu_custom_call.1} parent=11 // pred_region
        _
      $region24: #{tpu_custom_call.1} parent=11 // pred_fallthru
        _
    $region12: #{tpu_custom_call.1} parent=5 // pred_fallthru
      _
    %p165 = scmp.lt.s32.totalorder %s10, 2
    // Predicated region
    $region25: #{tpu_custom_call.1} parent=5 // pred_check
      %p166 = pneg %p165
    $region26: #{tpu_custom_call.1} parent=5 // pred_check_branch
      %168 = sbr.rel (%p166) target = $region28
    $region27: #{tpu_custom_call.1} parent=5 // pred_region
      // Predicated region
      $region29: #{tpu_custom_call.1} parent=27 // pred_check
        %p169 = pneg %p44
      $region30: #{tpu_custom_call.1} parent=27 // pred_check_branch
        %171 = sbr.rel (%p169) target = $region32
      $region31: #{tpu_custom_call.1} parent=27 // pred_region
        %p172 = scmp.lt.s32.totalorder %s17, 1
        %s173 = scalar_select %p172, %s17, 1
        %p174 = scmp.lt.s32.totalorder %s18, 0
        %s175 = scalar_select %p174, %s18, 0
        %s176 = smul.addr %s173, 16
        %s177 = sadd.s32 %s175, %s176
        %s178 = smul.addr %s177, 8
        %s179 = scalar_lea.vmem %s0, %s178
      $region32: #{tpu_custom_call.1} parent=27 // pred_fallthru
        _
    $region28: #{tpu_custom_call.1} parent=5 // pred_fallthru
      _
    %p180 = scmp.le.s32.totalorder 1, %s10
    %p181 = scmp.lt.s32.totalorder %s10, 3
    %p182 = pnand %p180, %p181
    %p183 = pneg %p182
    // Predicated region
    $region33: #{tpu_custom_call.1} parent=5 // pred_check
      _
    $region34: #{tpu_custom_call.1} parent=5 // pred_check_branch
      %185 = sbr.rel (%p182) target = $region36
    $region35: #{tpu_custom_call.1} parent=5 // pred_region
      %s186 = ssub.s32 %s10, 1
      %p187 = scmp.lt.s32.totalorder %s19, 1
      %s188 = scalar_select %p187, %s19, 1
      %p189 = scmp.lt.s32.totalorder %s20, 0
      %s190 = scalar_select %p189, %s20, 0
      %s191 = smul.addr %s188, 16
      %s192 = sadd.s32 %s190, %s191
      %s193 = smul.addr %s192, 8
      %s194 = scalar_lea.vmem %s0, %s193
      %p195 = pneg %p50
      %p196 = pneg %p47
      %p197 = pneg %p71
      %p198 = pneg %p68
      %p199 = pneg %p92
      %p200 = pneg %p89
      %p201 = pneg %p113
      %p202 = pneg %p110
      %p203 = pneg %p141
      %p204 = pneg %p138
      %p205 = scmp.lt.s32.totalorder %s19, 1
      %s206 = scalar_select %p205, %s19, 1
      %p207 = scmp.lt.s32.totalorder %s20, 0
      %s208 = scalar_select %p207, %s20, 0
      %s209 = smul.addr %s206, 16
      %s210 = sadd.s32 %s208, %s209
      %s211 = smul.addr %s210, 8
      %s212 = scalar_lea.vmem %s4, %s211
      %p213 = scmp.lt.s32.totalorder %s19, 1
      %s214 = scalar_select %p213, %s19, 1
      %p215 = scmp.lt.s32.totalorder %s20, 0
      %s216 = scalar_select %p215, %s20, 0
      %s217 = smul.addr %s214, 16
      %s218 = sadd.s32 %s216, %s217
      %s219 = smul.addr %s218, 8
      %s220 = scalar_lea.vmem %s0, %s219
      %p221 = scmp.lt.s32.totalorder %s19, 1
      %s222 = scalar_select %p221, %s19, 1
      %p223 = scmp.lt.s32.totalorder %s20, 0
      %s224 = scalar_select %p223, %s20, 0
      %s225 = smul.addr %s222, 16
      %s226 = sadd.s32 %s224, %s225
      %s227 = smul.addr %s226, 8
      %s228 = scalar_lea.vmem %s4, %s227
      %v229 = vld [vmem:[%s1] sm:$0xff]
      %v230 = vld [vmem:[%s1 + $0x8] sm:$0xff]
      %v231 = vld [vmem:[%s1 + $0x10] sm:$0xff]
      %v232 = vld [vmem:[%s1 + $0x18] sm:$0xff]
      %v233 = vld [vmem:[%s1 + $0x20] sm:$0xff]
      %v234 = vld [vmem:[%s1 + $0x28] sm:$0xff]
      %v235 = vld [vmem:[%s1 + $0x30] sm:$0xff]
      %v236 = vld [vmem:[%s1 + $0x38] sm:$0xff]
      %v237 = vld [vmem:[%s1 + $0x40] sm:$0xff]
      %v238 = vld [vmem:[%s1 + $0x48] sm:$0xff]
      %v239 = vld [vmem:[%s1 + $0x50] sm:$0xff]
      %v240 = vld [vmem:[%s1 + $0x58] sm:$0xff]
      %v241 = vld [vmem:[%s1 + $0x60] sm:$0xff]
      %v242 = vld [vmem:[%s1 + $0x68] sm:$0xff]
      %v243 = vld [vmem:[%s1 + $0x70] sm:$0xff]
      %v244 = vld [vmem:[%s1 + $0x78] sm:$0xff]
      %v245 = vld [vmem:[%s2] sm:$0xff]
      %v246 = vld [vmem:[%s2 + $0x8] sm:$0xff]
      %v247 = vld [vmem:[%s2 + $0x10] sm:$0xff]
      %v248 = vld [vmem:[%s2 + $0x18] sm:$0xff]
      %v249 = vld [vmem:[%s2 + $0x20] sm:$0xff]
      %v250 = vld [vmem:[%s2 + $0x28] sm:$0xff]
      %v251 = vld [vmem:[%s2 + $0x30] sm:$0xff]
      %v252 = vld [vmem:[%s2 + $0x38] sm:$0xff]
      %v253 = vld [vmem:[%s2 + $0x40] sm:$0xff]
      %v254 = vld [vmem:[%s2 + $0x48] sm:$0xff]
      %v255 = vld [vmem:[%s2 + $0x50] sm:$0xff]
      %v256 = vld [vmem:[%s2 + $0x58] sm:$0xff]
      %v257 = vld [vmem:[%s2 + $0x60] sm:$0xff]
      %v258 = vld [vmem:[%s2 + $0x68] sm:$0xff]
      %v259 = vld [vmem:[%s2 + $0x70] sm:$0xff]
      %v260 = vld [vmem:[%s2 + $0x78] sm:$0xff]
      %v261 = vld [vmem:[%s3] sm:$0xf]
      %v262 = vld [vmem:[%s220] sm:$0xff]
      %v263 = vld [vmem:[%s220 + $0x8] sm:$0xff]
      %v264 = vld [vmem:[%s220 + $0x10] sm:$0xff]
      %v265 = vld [vmem:[%s220 + $0x18] sm:$0xff]
      %v266 = vld [vmem:[%s220 + $0x20] sm:$0xff]
      %v267 = vld [vmem:[%s220 + $0x28] sm:$0xff]
      %v268 = vld [vmem:[%s220 + $0x30] sm:$0xff]
      %v269 = vld [vmem:[%s220 + $0x38] sm:$0xff]
      %v270 = vld [vmem:[%s220 + $0x40] sm:$0xff]
      %v271 = vld [vmem:[%s220 + $0x48] sm:$0xff]
      %v272 = vld [vmem:[%s220 + $0x50] sm:$0xff]
      %v273 = vld [vmem:[%s220 + $0x58] sm:$0xff]
      %v274 = vld [vmem:[%s220 + $0x60] sm:$0xff]
      %v275 = vld [vmem:[%s220 + $0x68] sm:$0xff]
      %v276 = vld [vmem:[%s220 + $0x70] sm:$0xff]
      %v277 = vld [vmem:[%s220 + $0x78] sm:$0xff]
      %v278 = vmul.f32 %v262, 0.5
      %v279 = vmul.f32 %v263, 0.5
      %v280 = vmul.f32 %v264, 0.5
      %v281 = vmul.f32 %v265, 0.5
      %v282 = vmul.f32 %v266, 0.5
      %v283 = vmul.f32 %v267, 0.5
      %v284 = vmul.f32 %v268, 0.5
      %v285 = vmul.f32 %v269, 0.5
      %v286 = vmul.f32 %v270, 0.5
      %v287 = vmul.f32 %v271, 0.5
      %v288 = vmul.f32 %v272, 0.5
      %v289 = vmul.f32 %v273, 0.5
      %v290 = vmul.f32 %v274, 0.5
      %v291 = vmul.f32 %v275, 0.5
      %v292 = vmul.f32 %v276, 0.5
      %v293 = vmul.f32 %v277, 0.5
      %vm294 = vcmask 31744
      %v296 = vsel %vm294, %v278, 0
      %v299 = vsel %vm294, %v279, 0
      %v302 = vsel %vm294, %v280, 0
      %v305 = vsel %vm294, %v281, 0
      %v308 = vsel %vm294, %v282, 0
      %v311 = vsel %vm294, %v283, 0
      %v314 = vsel %vm294, %v284, 0
      %v317 = vsel %vm294, %v285, 0
      %v320 = vsel %vm294, %v286, 0
      %v323 = vsel %vm294, %v287, 0
      %v326 = vsel %vm294, %v288, 0
      %v329 = vsel %vm294, %v289, 0
      %v332 = vsel %vm294, %v290, 0
      %v335 = vsel %vm294, %v291, 0
      %v338 = vsel %vm294, %v292, 0
      %v341 = vsel %vm294, %v293, 0
      %v344 = vsel %vm294, %v262, 0
      %v347 = vsel %vm294, %v263, 0
      %v350 = vsel %vm294, %v264, 0
      %v353 = vsel %vm294, %v265, 0
      %v356 = vsel %vm294, %v266, 0
      %v359 = vsel %vm294, %v267, 0
      %v362 = vsel %vm294, %v268, 0
      %v365 = vsel %vm294, %v269, 0
      %v368 = vsel %vm294, %v270, 0
      %v371 = vsel %vm294, %v271, 0
      %v374 = vsel %vm294, %v272, 0
      %v377 = vsel %vm294, %v273, 0
      %v380 = vsel %vm294, %v274, 0
      %v383 = vsel %vm294, %v275, 0
      %v386 = vsel %vm294, %v276, 0
      %v389 = vsel %vm294, %v277, 0
      %391 = vmatpush.xpose.msra.mxu0 %v389
      %392 = vmatpush.xpose.msra.mxu0 %v386
      %393 = vmatpush.xpose.msra.mxu0 %v383
      %394 = vmatpush.xpose.msra.mxu0 %v380
      %395 = vmatpush.xpose.msra.mxu0 %v377
      %396 = vmatpush.xpose.msra.mxu0 %v374
      %397 = vmatpush.xpose.msra.mxu0 %v371
      %398 = vmatpush.xpose.msra.mxu0 %v368
      %399 = vmatpush.xpose.msra.mxu0 %v365
      %400 = vmatpush.xpose.msra.mxu0 %v362
      %401 = vmatpush.xpose.msra.mxu0 %v359
      %402 = vmatpush.xpose.msra.mxu0 %v356
      %403 = vmatpush.xpose.msra.mxu0 %v353
      %404 = vmatpush.xpose.msra.mxu0 %v350
      %405 = vmatpush.xpose.msra.mxu0 %v347
      %406 = vmatpush.xpose.msra.mxu0 %v344
      %407 = vmatmul.f32.gmra.mxu0 %v296
      %v408 = vpop.f32.mrf.mxu0
      %v409 = vadd.f32 %v245, %v408
      %410 = vmatmul.f32.gmra.mxu0 %v299
      %v411 = vpop.f32.mrf.mxu0
      %v412 = vadd.f32 %v246, %v411
      %413 = vmatmul.f32.gmra.mxu0 %v302
      %v414 = vpop.f32.mrf.mxu0
      %v415 = vadd.f32 %v247, %v414
      %416 = vmatmul.f32.gmra.mxu0 %v305
      %v417 = vpop.f32.mrf.mxu0
      %v418 = vadd.f32 %v248, %v417
      %419 = vmatmul.f32.gmra.mxu0 %v308
      %v420 = vpop.f32.mrf.mxu0
      %v421 = vadd.f32 %v249, %v420
      %422 = vmatmul.f32.gmra.mxu0 %v311
      %v423 = vpop.f32.mrf.mxu0
      %v424 = vadd.f32 %v250, %v423
      %425 = vmatmul.f32.gmra.mxu0 %v314
      %v426 = vpop.f32.mrf.mxu0
      %v427 = vadd.f32 %v251, %v426
      %428 = vmatmul.f32.gmra.mxu0 %v317
      %v429 = vpop.f32.mrf.mxu0
      %v430 = vadd.f32 %v252, %v429
      %431 = vmatmul.f32.gmra.mxu0 %v320
      %v432 = vpop.f32.mrf.mxu0
      %v433 = vadd.f32 %v253, %v432
      %434 = vmatmul.f32.gmra.mxu0 %v323
      %v435 = vpop.f32.mrf.mxu0
      %v436 = vadd.f32 %v254, %v435
      %437 = vmatmul.f32.gmra.mxu0 %v326
      %v438 = vpop.f32.mrf.mxu0
      %v439 = vadd.f32 %v255, %v438
      %440 = vmatmul.f32.gmra.mxu0 %v329
      %v441 = vpop.f32.mrf.mxu0
      %v442 = vadd.f32 %v256, %v441
      %443 = vmatmul.f32.gmra.mxu0 %v332
      %v444 = vpop.f32.mrf.mxu0
      %v445 = vadd.f32 %v257, %v444
      %446 = vmatmul.f32.gmra.mxu0 %v335
      %v447 = vpop.f32.mrf.mxu0
      %v448 = vadd.f32 %v258, %v447
      %449 = vmatmul.f32.gmra.mxu0 %v338
      %v450 = vpop.f32.mrf.mxu0
      %v451 = vadd.f32 %v259, %v450
      %452 = vmatmul.f32.gmra.mxu0 %v341
      %v453 = vpop.f32.mrf.mxu0
      %v454 = vadd.f32 %v260, %v453
      %455 = vdwg.mxu0
      %456 = vmax.xlane.f32.xlu0 %v409
      %v457 = vpop.xlane.xlu0 %456
      %458 = vmax.xlane.f32.xlu0 %v412
      %v459 = vpop.xlane.xlu0 %458
      %460 = vmax.xlane.f32.xlu0 %v415
      %v461 = vpop.xlane.xlu0 %460
      %462 = vmax.xlane.f32.xlu0 %v418
      %v463 = vpop.xlane.xlu0 %462
      %464 = vmax.xlane.f32.xlu0 %v421
      %v465 = vpop.xlane.xlu0 %464
      %466 = vmax.xlane.f32.xlu0 %v424
      %v467 = vpop.xlane.xlu0 %466
      %468 = vmax.xlane.f32.xlu0 %v427
      %v469 = vpop.xlane.xlu0 %468
      %470 = vmax.xlane.f32.xlu0 %v430
      %v471 = vpop.xlane.xlu0 %470
      %472 = vmax.xlane.f32.xlu0 %v433
      %v473 = vpop.xlane.xlu0 %472
      %474 = vmax.xlane.f32.xlu0 %v436
      %v475 = vpop.xlane.xlu0 %474
      %476 = vmax.xlane.f32.xlu0 %v439
      %v477 = vpop.xlane.xlu0 %476
      %478 = vmax.xlane.f32.xlu0 %v442
      %v479 = vpop.xlane.xlu0 %478
      %480 = vmax.xlane.f32.xlu0 %v445
      %v481 = vpop.xlane.xlu0 %480
      %482 = vmax.xlane.f32.xlu0 %v448
      %v483 = vpop.xlane.xlu0 %482
      %484 = vmax.xlane.f32.xlu0 %v451
      %v485 = vpop.xlane.xlu0 %484
      %486 = vmax.xlane.f32.xlu0 %v454
      %v487 = vpop.xlane.xlu0 %486
      %v488 = vsub.f32 %v409, %v457
      %v489 = vsub.f32 %v412, %v459
      %v490 = vsub.f32 %v415, %v461
      %v491 = vsub.f32 %v418, %v463
      %v492 = vsub.f32 %v421, %v465
      %v493 = vsub.f32 %v424, %v467
      %v494 = vsub.f32 %v427, %v469
      %v495 = vsub.f32 %v430, %v471
      %v496 = vsub.f32 %v433, %v473
      %v497 = vsub.f32 %v436, %v475
      %v498 = vsub.f32 %v439, %v477
      %v499 = vsub.f32 %v442, %v479
      %v500 = vsub.f32 %v445, %v481
      %v501 = vsub.f32 %v448, %v483
      %v502 = vsub.f32 %v451, %v485
      %v503 = vsub.f32 %v454, %v487
      %v504 = vmul.f32 %v488, 1.442695
      %v505 = vpow.pop %v504
      %v506 = vmul.f32 %v489, 1.442695
      %v507 = vpow.pop %v506
      %v508 = vmul.f32 %v490, 1.442695
      %v509 = vpow.pop %v508
      %v510 = vmul.f32 %v491, 1.442695
      %v511 = vpow.pop %v510
      %v512 = vmul.f32 %v492, 1.442695
      %v513 = vpow.pop %v512
      %v514 = vmul.f32 %v493, 1.442695
      %v515 = vpow.pop %v514
      %v516 = vmul.f32 %v494, 1.442695
      %v517 = vpow.pop %v516
      %v518 = vmul.f32 %v495, 1.442695
      %v519 = vpow.pop %v518
      %v520 = vmul.f32 %v496, 1.442695
      %v521 = vpow.pop %v520
      %v522 = vmul.f32 %v497, 1.442695
      %v523 = vpow.pop %v522
      %v524 = vmul.f32 %v498, 1.442695
      %v525 = vpow.pop %v524
      %v526 = vmul.f32 %v499, 1.442695
      %v527 = vpow.pop %v526
      %v528 = vmul.f32 %v500, 1.442695
      %v529 = vpow.pop %v528
      %v530 = vmul.f32 %v501, 1.442695
      %v531 = vpow.pop %v530
      %v532 = vmul.f32 %v502, 1.442695
      %v533 = vpow.pop %v532
      %v534 = vmul.f32 %v503, 1.442695
      %v535 = vpow.pop %v534
      %536 = vadd.xlane.f32.xlu0 %v505
      %v537 = vpop.xlane.xlu0 %536
      %538 = vadd.xlane.f32.xlu0 %v507
      %v539 = vpop.xlane.xlu0 %538
      %540 = vadd.xlane.f32.xlu0 %v509
      %v541 = vpop.xlane.xlu0 %540
      %542 = vadd.xlane.f32.xlu0 %v511
      %v543 = vpop.xlane.xlu0 %542
      %544 = vadd.xlane.f32.xlu0 %v513
      %v545 = vpop.xlane.xlu0 %544
      %546 = vadd.xlane.f32.xlu0 %v515
      %v547 = vpop.xlane.xlu0 %546
      %548 = vadd.xlane.f32.xlu0 %v517
      %v549 = vpop.xlane.xlu0 %548
      %550 = vadd.xlane.f32.xlu0 %v519
      %v551 = vpop.xlane.xlu0 %550
      %552 = vadd.xlane.f32.xlu0 %v521
      %v553 = vpop.xlane.xlu0 %552
      %554 = vadd.xlane.f32.xlu0 %v523
      %v555 = vpop.xlane.xlu0 %554
      %556 = vadd.xlane.f32.xlu0 %v525
      %v557 = vpop.xlane.xlu0 %556
      %558 = vadd.xlane.f32.xlu0 %v527
      %v559 = vpop.xlane.xlu0 %558
      %560 = vadd.xlane.f32.xlu0 %v529
      %v561 = vpop.xlane.xlu0 %560
      %562 = vadd.xlane.f32.xlu0 %v531
      %v563 = vpop.xlane.xlu0 %562
      %564 = vadd.xlane.f32.xlu0 %v533
      %v565 = vpop.xlane.xlu0 %564
      %566 = vadd.xlane.f32.xlu0 %v535
      %v567 = vpop.xlane.xlu0 %566
      %v568 = vrcp.pop %v537
      %v569 = vmul.f32 %v537, %v568
      %v570 = vsub.f32 1.0, %v569
      %v571 = vmul.f32 %v568, %v570
      %v572 = vadd.f32 %v568, %v571
      %vm573 = vweird.f32 %v537
      %vm574 = vweird.f32 %v568
      %vm575 = vmor %vm573, %vm574
      %v576 = vsel %vm575, %v568, %v572
      %v577 = vand.u32 2147483647, %v537
      %vm578 = vcmp.eq.f32.partialorder %v577, 8.507059e+37
      %v579 = vand.u32 %v537, 2147483648
      %v580 = vor.u32 1.1754944e-38, %v579
      %v581 = vsel %vm578, %v580, %v576
      %v582 = vrcp.pop %v539
      %v583 = vmul.f32 %v539, %v582
      %v584 = vsub.f32 1.0, %v583
      %v585 = vmul.f32 %v582, %v584
      %v586 = vadd.f32 %v582, %v585
      %vm587 = vweird.f32 %v539
      %vm588 = vweird.f32 %v582
      %vm589 = vmor %vm587, %vm588
      %v590 = vsel %vm589, %v582, %v586
      %v591 = vand.u32 2147483647, %v539
      %vm592 = vcmp.eq.f32.partialorder %v591, 8.507059e+37
      %v593 = vand.u32 %v539, 2147483648
      %v594 = vor.u32 1.1754944e-38, %v593
      %v595 = vsel %vm592, %v594, %v590
      %v596 = vrcp.pop %v541
      %v597 = vmul.f32 %v541, %v596
      %v598 = vsub.f32 1.0, %v597
      %v599 = vmul.f32 %v596, %v598
      %v600 = vadd.f32 %v596, %v599
      %vm601 = vweird.f32 %v541
      %vm602 = vweird.f32 %v596
      %vm603 = vmor %vm601, %vm602
      %v604 = vsel %vm603, %v596, %v600
      %v605 = vand.u32 2147483647, %v541
      %vm606 = vcmp.eq.f32.partialorder %v605, 8.507059e+37
      %v607 = vand.u32 %v541, 2147483648
      %v608 = vor.u32 1.1754944e-38, %v607
      %v609 = vsel %vm606, %v608, %v604
      %v610 = vrcp.pop %v543
      %v611 = vmul.f32 %v543, %v610
      %v612 = vsub.f32 1.0, %v611
      %v613 = vmul.f32 %v610, %v612
      %v614 = vadd.f32 %v610, %v613
      %vm615 = vweird.f32 %v543
      %vm616 = vweird.f32 %v610
      %vm617 = vmor %vm615, %vm616
      %v618 = vsel %vm617, %v610, %v614
      %v619 = vand.u32 2147483647, %v543
      %vm620 = vcmp.eq.f32.partialorder %v619, 8.507059e+37
      %v621 = vand.u32 %v543, 2147483648
      %v622 = vor.u32 1.1754944e-38, %v621
      %v623 = vsel %vm620, %v622, %v618
      %v624 = vrcp.pop %v545
      %v625 = vmul.f32 %v545, %v624
      %v626 = vsub.f32 1.0, %v625
      %v627 = vmul.f32 %v624, %v626
      %v628 = vadd.f32 %v624, %v627
      %vm629 = vweird.f32 %v545
      %vm630 = vweird.f32 %v624
      %vm631 = vmor %vm629, %vm630
      %v632 = vsel %vm631, %v624, %v628
      %v633 = vand.u32 2147483647, %v545
      %vm634 = vcmp.eq.f32.partialorder %v633, 8.507059e+37
      %v635 = vand.u32 %v545, 2147483648
      %v636 = vor.u32 1.1754944e-38, %v635
      %v637 = vsel %vm634, %v636, %v632
      %v638 = vrcp.pop %v547
      %v639 = vmul.f32 %v547, %v638
      %v640 = vsub.f32 1.0, %v639
      %v641 = vmul.f32 %v638, %v640
      %v642 = vadd.f32 %v638, %v641
      %vm643 = vweird.f32 %v547
      %vm644 = vweird.f32 %v638
      %vm645 = vmor %vm643, %vm644
      %v646 = vsel %vm645, %v638, %v642
      %v647 = vand.u32 2147483647, %v547
      %vm648 = vcmp.eq.f32.partialorder %v647, 8.507059e+37
      %v649 = vand.u32 %v547, 2147483648
      %v650 = vor.u32 1.1754944e-38, %v649
      %v651 = vsel %vm648, %v650, %v646
      %v652 = vrcp.pop %v549
      %v653 = vmul.f32 %v549, %v652
      %v654 = vsub.f32 1.0, %v653
      %v655 = vmul.f32 %v652, %v654
      %v656 = vadd.f32 %v652, %v655
      %vm657 = vweird.f32 %v549
      %vm658 = vweird.f32 %v652
      %vm659 = vmor %vm657, %vm658
      %v660 = vsel %vm659, %v652, %v656
      %v661 = vand.u32 2147483647, %v549
      %vm662 = vcmp.eq.f32.partialorder %v661, 8.507059e+37
      %v663 = vand.u32 %v549, 2147483648
      %v664 = vor.u32 1.1754944e-38, %v663
      %v665 = vsel %vm662, %v664, %v660
      %v666 = vrcp.pop %v551
      %v667 = vmul.f32 %v551, %v666
      %v668 = vsub.f32 1.0, %v667
      %v669 = vmul.f32 %v666, %v668
      %v670 = vadd.f32 %v666, %v669
      %vm671 = vweird.f32 %v551
      %vm672 = vweird.f32 %v666
      %vm673 = vmor %vm671, %vm672
      %v674 = vsel %vm673, %v666, %v670
      %v675 = vand.u32 2147483647, %v551
      %vm676 = vcmp.eq.f32.partialorder %v675, 8.507059e+37
      %v677 = vand.u32 %v551, 2147483648
      %v678 = vor.u32 1.1754944e-38, %v677
      %v679 = vsel %vm676, %v678, %v674
      %v680 = vrcp.pop %v553
      %v681 = vmul.f32 %v553, %v680
      %v682 = vsub.f32 1.0, %v681
      %v683 = vmul.f32 %v680, %v682
      %v684 = vadd.f32 %v680, %v683
      %vm685 = vweird.f32 %v553
      %vm686 = vweird.f32 %v680
      %vm687 = vmor %vm685, %vm686
      %v688 = vsel %vm687, %v680, %v684
      %v689 = vand.u32 2147483647, %v553
      %vm690 = vcmp.eq.f32.partialorder %v689, 8.507059e+37
      %v691 = vand.u32 %v553, 2147483648
      %v692 = vor.u32 1.1754944e-38, %v691
      %v693 = vsel %vm690, %v692, %v688
      %v694 = vrcp.pop %v555
      %v695 = vmul.f32 %v555, %v694
      %v696 = vsub.f32 1.0, %v695
      %v697 = vmul.f32 %v694, %v696
      %v698 = vadd.f32 %v694, %v697
      %vm699 = vweird.f32 %v555
      %vm700 = vweird.f32 %v694
      %vm701 = vmor %vm699, %vm700
      %v702 = vsel %vm701, %v694, %v698
      %v703 = vand.u32 2147483647, %v555
      %vm704 = vcmp.eq.f32.partialorder %v703, 8.507059e+37
      %v705 = vand.u32 %v555, 2147483648
      %v706 = vor.u32 1.1754944e-38, %v705
      %v707 = vsel %vm704, %v706, %v702
      %v708 = vrcp.pop %v557
      %v709 = vmul.f32 %v557, %v708
      %v710 = vsub.f32 1.0, %v709
      %v711 = vmul.f32 %v708, %v710
      %v712 = vadd.f32 %v708, %v711
      %vm713 = vweird.f32 %v557
      %vm714 = vweird.f32 %v708
      %vm715 = vmor %vm713, %vm714
      %v716 = vsel %vm715, %v708, %v712
      %v717 = vand.u32 2147483647, %v557
      %vm718 = vcmp.eq.f32.partialorder %v717, 8.507059e+37
      %v719 = vand.u32 %v557, 2147483648
      %v720 = vor.u32 1.1754944e-38, %v719
      %v721 = vsel %vm718, %v720, %v716
      %v722 = vrcp.pop %v559
      %v723 = vmul.f32 %v559, %v722
      %v724 = vsub.f32 1.0, %v723
      %v725 = vmul.f32 %v722, %v724
      %v726 = vadd.f32 %v722, %v725
      %vm727 = vweird.f32 %v559
      %vm728 = vweird.f32 %v722
      %vm729 = vmor %vm727, %vm728
      %v730 = vsel %vm729, %v722, %v726
      %v731 = vand.u32 2147483647, %v559
      %vm732 = vcmp.eq.f32.partialorder %v731, 8.507059e+37
      %v733 = vand.u32 %v559, 2147483648
      %v734 = vor.u32 1.1754944e-38, %v733
      %v735 = vsel %vm732, %v734, %v730
      %v736 = vrcp.pop %v561
      %v737 = vmul.f32 %v561, %v736
      %v738 = vsub.f32 1.0, %v737
      %v739 = vmul.f32 %v736, %v738
      %v740 = vadd.f32 %v736, %v739
      %vm741 = vweird.f32 %v561
      %vm742 = vweird.f32 %v736
      %vm743 = vmor %vm741, %vm742
      %v744 = vsel %vm743, %v736, %v740
      %v745 = vand.u32 2147483647, %v561
      %vm746 = vcmp.eq.f32.partialorder %v745, 8.507059e+37
      %v747 = vand.u32 %v561, 2147483648
      %v748 = vor.u32 1.1754944e-38, %v747
      %v749 = vsel %vm746, %v748, %v744
      %v750 = vrcp.pop %v563
      %v751 = vmul.f32 %v563, %v750
      %v752 = vsub.f32 1.0, %v751
      %v753 = vmul.f32 %v750, %v752
      %v754 = vadd.f32 %v750, %v753
      %vm755 = vweird.f32 %v563
      %vm756 = vweird.f32 %v750
      %vm757 = vmor %vm755, %vm756
      %v758 = vsel %vm757, %v750, %v754
      %v759 = vand.u32 2147483647, %v563
      %vm760 = vcmp.eq.f32.partialorder %v759, 8.507059e+37
      %v761 = vand.u32 %v563, 2147483648
      %v762 = vor.u32 1.1754944e-38, %v761
      %v763 = vsel %vm760, %v762, %v758
      %v764 = vrcp.pop %v565
      %v765 = vmul.f32 %v565, %v764
      %v766 = vsub.f32 1.0, %v765
      %v767 = vmul.f32 %v764, %v766
      %v768 = vadd.f32 %v764, %v767
      %vm769 = vweird.f32 %v565
      %vm770 = vweird.f32 %v764
      %vm771 = vmor %vm769, %vm770
      %v772 = vsel %vm771, %v764, %v768
      %v773 = vand.u32 2147483647, %v565
      %vm774 = vcmp.eq.f32.partialorder %v773, 8.507059e+37
      %v775 = vand.u32 %v565, 2147483648
      %v776 = vor.u32 1.1754944e-38, %v775
      %v777 = vsel %vm774, %v776, %v772
      %v778 = vrcp.pop %v567
      %v779 = vmul.f32 %v567, %v778
      %v780 = vsub.f32 1.0, %v779
      %v781 = vmul.f32 %v778, %v780
      %v782 = vadd.f32 %v778, %v781
      %vm783 = vweird.f32 %v567
      %vm784 = vweird.f32 %v778
      %vm785 = vmor %vm783, %vm784
      %v786 = vsel %vm785, %v778, %v782
      %v787 = vand.u32 2147483647, %v567
      %vm788 = vcmp.eq.f32.partialorder %v787, 8.507059e+37
      %v789 = vand.u32 %v567, 2147483648
      %v790 = vor.u32 1.1754944e-38, %v789
      %v791 = vsel %vm788, %v790, %v786
      %v792 = vmul.f32 %v505, %v581
      %v793 = vmul.f32 %v507, %v595
      %v794 = vmul.f32 %v509, %v609
      %v795 = vmul.f32 %v511, %v623
      %v796 = vmul.f32 %v513, %v637
      %v797 = vmul.f32 %v515, %v651
      %v798 = vmul.f32 %v517, %v665
      %v799 = vmul.f32 %v519, %v679
      %v800 = vmul.f32 %v521, %v693
      %v801 = vmul.f32 %v523, %v707
      %v802 = vmul.f32 %v525, %v721
      %v803 = vmul.f32 %v527, %v735
      %v804 = vmul.f32 %v529, %v749
      %v805 = vmul.f32 %v531, %v763
      %v806 = vmul.f32 %v533, %v777
      %v807 = vmul.f32 %v535, %v791
      %v808 = vmul.f32 %v229, %v792
      %v809 = vmul.f32 %v230, %v793
      %v810 = vmul.f32 %v231, %v794
      %v811 = vmul.f32 %v232, %v795
      %v812 = vmul.f32 %v233, %v796
      %v813 = vmul.f32 %v234, %v797
      %v814 = vmul.f32 %v235, %v798
      %v815 = vmul.f32 %v236, %v799
      %v816 = vmul.f32 %v237, %v800
      %v817 = vmul.f32 %v238, %v801
      %v818 = vmul.f32 %v239, %v802
      %v819 = vmul.f32 %v240, %v803
      %v820 = vmul.f32 %v241, %v804
      %v821 = vmul.f32 %v242, %v805
      %v822 = vmul.f32 %v243, %v806
      %v823 = vmul.f32 %v244, %v807
      %824 = vmatpush.msra.mxu0 %v277
      %825 = vmatpush.msra.mxu0 %v276
      %826 = vmatpush.msra.mxu0 %v275
      %827 = vmatpush.msra.mxu0 %v274
      %828 = vmatpush.msra.mxu0 %v273
      %829 = vmatpush.msra.mxu0 %v272
      %830 = vmatpush.msra.mxu0 %v271
      %831 = vmatpush.msra.mxu0 %v270
      %832 = vmatpush.msra.mxu0 %v269
      %833 = vmatpush.msra.mxu0 %v268
      %834 = vmatpush.msra.mxu0 %v267
      %835 = vmatpush.msra.mxu0 %v266
      %836 = vmatpush.msra.mxu0 %v265
      %837 = vmatpush.msra.mxu0 %v264
      %838 = vmatpush.msra.mxu0 %v263
      %839 = vmatpush.msra.mxu0 %v262
      %840 = vmatmul.f32.gmra.mxu0 %v808
      %v841 = vpop.f32.mrf.mxu0
      %v842 = vadd.f32 0.0, %v841
      %843 = vmatmul.f32.gmra.mxu0 %v809
      %v844 = vpop.f32.mrf.mxu0
      %v845 = vadd.f32 0.0, %v844
      %846 = vmatmul.f32.gmra.mxu0 %v810
      %v847 = vpop.f32.mrf.mxu0
      %v848 = vadd.f32 0.0, %v847
      %849 = vmatmul.f32.gmra.mxu0 %v811
      %v850 = vpop.f32.mrf.mxu0
      %v851 = vadd.f32 0.0, %v850
      %852 = vmatmul.f32.gmra.mxu0 %v812
      %v853 = vpop.f32.mrf.mxu0
      %v854 = vadd.f32 0.0, %v853
      %855 = vmatmul.f32.gmra.mxu0 %v813
      %v856 = vpop.f32.mrf.mxu0
      %v857 = vadd.f32 0.0, %v856
      %858 = vmatmul.f32.gmra.mxu0 %v814
      %v859 = vpop.f32.mrf.mxu0
      %v860 = vadd.f32 0.0, %v859
      %861 = vmatmul.f32.gmra.mxu0 %v815
      %v862 = vpop.f32.mrf.mxu0
      %v863 = vadd.f32 0.0, %v862
      %864 = vmatmul.f32.gmra.mxu0 %v816
      %v865 = vpop.f32.mrf.mxu0
      %v866 = vadd.f32 0.0, %v865
      %867 = vmatmul.f32.gmra.mxu0 %v817
      %v868 = vpop.f32.mrf.mxu0
      %v869 = vadd.f32 0.0, %v868
      %870 = vmatmul.f32.gmra.mxu0 %v818
      %v871 = vpop.f32.mrf.mxu0
      %v872 = vadd.f32 0.0, %v871
      %873 = vmatmul.f32.gmra.mxu0 %v819
      %v874 = vpop.f32.mrf.mxu0
      %v875 = vadd.f32 0.0, %v874
      %876 = vmatmul.f32.gmra.mxu0 %v820
      %v877 = vpop.f32.mrf.mxu0
      %v878 = vadd.f32 0.0, %v877
      %879 = vmatmul.f32.gmra.mxu0 %v821
      %v880 = vpop.f32.mrf.mxu0
      %v881 = vadd.f32 0.0, %v880
      %882 = vmatmul.f32.gmra.mxu0 %v822
      %v883 = vpop.f32.mrf.mxu0
      %v884 = vadd.f32 0.0, %v883
      %885 = vmatmul.f32.gmra.mxu0 %v823
      %v886 = vpop.f32.mrf.mxu0
      %v887 = vadd.f32 0.0, %v886
      %888 = vdwg.mxu0
      %v890 = vsel %vm294, %v842, 0
      %v893 = vsel %vm294, %v845, 0
      %v896 = vsel %vm294, %v848, 0
      %v899 = vsel %vm294, %v851, 0
      %v902 = vsel %vm294, %v854, 0
      %v905 = vsel %vm294, %v857, 0
      %v908 = vsel %vm294, %v860, 0
      %v911 = vsel %vm294, %v863, 0
      %v914 = vsel %vm294, %v866, 0
      %v917 = vsel %vm294, %v869, 0
      %v920 = vsel %vm294, %v872, 0
      %v923 = vsel %vm294, %v875, 0
      %v926 = vsel %vm294, %v878, 0
      %v929 = vsel %vm294, %v881, 0
      %v932 = vsel %vm294, %v884, 0
      %v935 = vsel %vm294, %v887, 0
      %vm937 = vcmask 1043456
      %v939 = vsel %vm937, %v261, 0
      %941 = vmatpush.msra.mxu0 0.0
      %942 = vmatpush.msra.mxu0 0.0
      %943 = vmatpush.msra.mxu0 0.0
      %944 = vmatpush.msra.mxu0 0.0
      %945 = vmatpush.msra.mxu0 0.0
      %946 = vmatpush.msra.mxu0 0.0
      %947 = vmatpush.msra.mxu0 0.0
      %948 = vmatpush.msra.mxu0 0.0
      %949 = vmatpush.msra.mxu0 0.0
      %950 = vmatpush.msra.mxu0 0.0
      %951 = vmatpush.msra.mxu0 0.0
      %952 = vmatpush.msra.mxu0 0.0
      %953 = vmatpush.msra.mxu0 0.0
      %954 = vmatpush.msra.mxu0 0.0
      %955 = vmatpush.msra.mxu0 0.0
      %956 = vmatpush.msra.mxu0 %v939
      %957 = vmatmul.f32.gmra.mxu0 %v890
      %v958 = vpop.f32.mrf.mxu0
      %v959 = vadd.f32 0.0, %v958
      %960 = vmatmul.f32.gmra.mxu0 %v893
      %v961 = vpop.f32.mrf.mxu0
      %v962 = vadd.f32 0.0, %v961
      %963 = vmatmul.f32.gmra.mxu0 %v896
      %v964 = vpop.f32.mrf.mxu0
      %v965 = vadd.f32 0.0, %v964
      %966 = vmatmul.f32.gmra.mxu0 %v899
      %v967 = vpop.f32.mrf.mxu0
      %v968 = vadd.f32 0.0, %v967
      %969 = vmatmul.f32.gmra.mxu0 %v902
      %v970 = vpop.f32.mrf.mxu0
      %v971 = vadd.f32 0.0, %v970
      %972 = vmatmul.f32.gmra.mxu0 %v905
      %v973 = vpop.f32.mrf.mxu0
      %v974 = vadd.f32 0.0, %v973
      %975 = vmatmul.f32.gmra.mxu0 %v908
      %v976 = vpop.f32.mrf.mxu0
      %v977 = vadd.f32 0.0, %v976
      %978 = vmatmul.f32.gmra.mxu0 %v911
      %v979 = vpop.f32.mrf.mxu0
      %v980 = vadd.f32 0.0, %v979
      %981 = vmatmul.f32.gmra.mxu0 %v914
      %v982 = vpop.f32.mrf.mxu0
      %v983 = vadd.f32 0.0, %v982
      %984 = vmatmul.f32.gmra.mxu0 %v917
      %v985 = vpop.f32.mrf.mxu0
      %v986 = vadd.f32 0.0, %v985
      %987 = vmatmul.f32.gmra.mxu0 %v920
      %v988 = vpop.f32.mrf.mxu0
      %v989 = vadd.f32 0.0, %v988
      %990 = vmatmul.f32.gmra.mxu0 %v923
      %v991 = vpop.f32.mrf.mxu0
      %v992 = vadd.f32 0.0, %v991
      %993 = vmatmul.f32.gmra.mxu0 %v926
      %v994 = vpop.f32.mrf.mxu0
      %v995 = vadd.f32 0.0, %v994
      %996 = vmatmul.f32.gmra.mxu0 %v929
      %v997 = vpop.f32.mrf.mxu0
      %v998 = vadd.f32 0.0, %v997
      %999 = vmatmul.f32.gmra.mxu0 %v932
      %v1000 = vpop.f32.mrf.mxu0
      %v1001 = vadd.f32 0.0, %v1000
      %1002 = vmatmul.f32.gmra.mxu0 %v935
      %v1003 = vpop.f32.mrf.mxu0
      %v1004 = vadd.f32 0.0, %v1003
      %1005 = vdwg.mxu0
      %v1006 = vmax.f32 %v959, 0.0
      %v1007 = vmax.f32 %v962, 0.0
      %v1008 = vmax.f32 %v965, 0.0
      %v1009 = vmax.f32 %v968, 0.0
      %v1010 = vmax.f32 %v971, 0.0
      %v1011 = vmax.f32 %v974, 0.0
      %v1012 = vmax.f32 %v977, 0.0
      %v1013 = vmax.f32 %v980, 0.0
      %v1014 = vmax.f32 %v983, 0.0
      %v1015 = vmax.f32 %v986, 0.0
      %v1016 = vmax.f32 %v989, 0.0
      %v1017 = vmax.f32 %v992, 0.0
      %v1018 = vmax.f32 %v995, 0.0
      %v1019 = vmax.f32 %v998, 0.0
      %v1020 = vmax.f32 %v1001, 0.0
      %v1021 = vmax.f32 %v1004, 0.0
      %vm1022 = vcmask 64512
      %1023 = vst.msk [vmem:[%s228] sm:$0xff] %vm1022, %v1006
      %1024 = vst.msk [vmem:[%s228 + $0x8] sm:$0xff] %vm1022, %v1007
      %1025 = vst.msk [vmem:[%s228 + $0x10] sm:$0xff] %vm1022, %v1008
      %1026 = vst.msk [vmem:[%s228 + $0x18] sm:$0xff] %vm1022, %v1009
      %1027 = vst.msk [vmem:[%s228 + $0x20] sm:$0xff] %vm1022, %v1010
      %1028 = vst.msk [vmem:[%s228 + $0x28] sm:$0xff] %vm1022, %v1011
      %1029 = vst.msk [vmem:[%s228 + $0x30] sm:$0xff] %vm1022, %v1012
      %1030 = vst.msk [vmem:[%s228 + $0x38] sm:$0xff] %vm1022, %v1013
      %1031 = vst.msk [vmem:[%s228 + $0x40] sm:$0xff] %vm1022, %v1014
      %1032 = vst.msk [vmem:[%s228 + $0x48] sm:$0xff] %vm1022, %v1015
      %1033 = vst.msk [vmem:[%s228 + $0x50] sm:$0xff] %vm1022, %v1016
      %1034 = vst.msk [vmem:[%s228 + $0x58] sm:$0xff] %vm1022, %v1017
      %1035 = vst.msk [vmem:[%s228 + $0x60] sm:$0xff] %vm1022, %v1018
      %1036 = vst.msk [vmem:[%s228 + $0x68] sm:$0xff] %vm1022, %v1019
      %1037 = vst.msk [vmem:[%s228 + $0x70] sm:$0xff] %vm1022, %v1020
      %1038 = vst.msk [vmem:[%s228 + $0x78] sm:$0xff] %vm1022, %v1021
      %p1039 = scmp.lt.s32.totalorder %s19, 1
      %s1040 = scalar_select %p1039, %s19, 1
      %p1041 = scmp.lt.s32.totalorder %s20, 0
      %s1042 = scalar_select %p1041, %s20, 0
      %s1043 = smul.addr %s1040, 16
      %s1044 = sadd.s32 %s1042, %s1043
      %s1045 = smul.addr %s1044, 8
      %s1046 = scalar_lea.vmem %s4, %s1045
      // Predicated region
      $region37: #{tpu_custom_call.1} parent=35 // pred_check
        %p1047 = pneg %p138
      $region38: #{tpu_custom_call.1} parent=35 // pred_check_branch
        %1049 = sbr.rel (%p1047) target = $region40
      $region39: #{tpu_custom_call.1} parent=35 // pred_region
        _
      $region40: #{tpu_custom_call.1} parent=35 // pred_fallthru
        _
    $region36: #{tpu_custom_call.1} parent=5 // pred_fallthru
      _
    %p1050 = scmp.le.s32.totalorder 2, %s10
    // Predicated region
    $region41: #{tpu_custom_call.1} parent=5 // pred_check
      %p1051 = pneg %p1050
    $region42: #{tpu_custom_call.1} parent=5 // pred_check_branch
      %1053 = sbr.rel (%p1051) target = $region44
    $region43: #{tpu_custom_call.1} parent=5 // pred_region
      %s1054 = ssub.s32 %s10, 2
      // Predicated region
      $region45: #{tpu_custom_call.1} parent=43 // pred_check
        %p1055 = pneg %p144
      $region46: #{tpu_custom_call.1} parent=43 // pred_check_branch
        %1057 = sbr.rel (%p1055) target = $region48
      $region47: #{tpu_custom_call.1} parent=43 // pred_region
        %p1058 = scmp.lt.s32.totalorder %s21, 1
        %s1059 = scalar_select %p1058, %s21, 1
        %p1060 = scmp.lt.s32.totalorder %s22, 0
        %s1061 = scalar_select %p1060, %s22, 0
        %s1062 = smul.addr %s1059, 16
        %s1063 = sadd.s32 %s1061, %s1062
        %s1064 = smul.addr %s1063, 8
        %s1065 = scalar_lea.vmem %s4, %s1064
      $region48: #{tpu_custom_call.1} parent=43 // pred_fallthru
        _
    $region44: #{tpu_custom_call.1} parent=5 // pred_fallthru
      _
  $region6: #{tpu_custom_call.1} parent=0 // loop_footer
    %s14 = sadd.s32 1, %s10
  $region7: #{tpu_custom_call.1} parent=0 // loop_footer_branch
    %9 = sbr.rel target = $region3
  $region8: #{tpu_custom_call.1} parent=0 // loop_exit
    _

</llo_original>
